<compile_context>
chip_gen: v7x
topology: tpu7x:2x2x1
jax: 0.10.0
libtpu: 0.0.40
codegen_flags: <defaults>
</compile_context>

<pallas_src>
import jax
import jax.numpy as jnp
from jax.experimental import pallas as pl
from jax.experimental.pallas import tpu as pltpu


def _cpg_kernel(ids_ref,              # [Bp, 1]  int32 domain ids (VMEM)
                embed_ref,            # [ndp, E] embedding table
                pcat_ref, pbcat_ref,  # [E, 2R], [1, 2R]   fused first projection
                wenc_ref, wbenc_ref,  # [R, enc_size], [1, enc_size]
                wdec_ref, wbdec_ref,  # [R, dec_size], [1, dec_size]
                enc_ref, dec_ref):    # outputs [Bp, enc_size], [Bp, dec_size]
    bp = ids_ref.shape[0]
    ndp = embed_ref.shape[0]
    r = wenc_ref.shape[0]

    # Vectorized embedding gather on the MXU: onehot[Bp, ndp] @ embed[ndp, E].
    # (Replaces a per-row dynamic-index loop; padded rows use id 0 and are
    #  dropped by the wrapper.)
    ids = ids_ref[...]                                               # [Bp, 1]
    iota = jax.lax.broadcasted_iota(jnp.int32, (bp, ndp), 1)         # [Bp, ndp]
    onehot = (iota == ids).astype(jnp.float32)                       # [Bp, ndp]
    x = jnp.dot(onehot, embed_ref[...],
                preferred_element_type=jnp.float32)                  # [Bp, E]

    # Single lane-dense first matmul covering both enc and dec projections.
    h = jnp.dot(x, pcat_ref[...],
                preferred_element_type=jnp.float32) + pbcat_ref[...]  # [Bp, 2R]
    h_enc = h[:, :r]
    h_dec = h[:, r:]

    enc_ref[...] = (jnp.dot(h_enc, wenc_ref[...],
                            preferred_element_type=jnp.float32)
                    + wbenc_ref[...]).astype(enc_ref.dtype)
    dec_ref[...] = (jnp.dot(h_dec, wdec_ref[...],
                            preferred_element_type=jnp.float32)
                    + wbdec_ref[...]).astype(dec_ref.dtype)


def cpg_forward(d, embed, p_cat_t, pb_cat, w_enc_t, wb_enc, w_dec_t, wb_dec):
    """Fused CPG forward.

    d        : int [B] domain ids
    embed    : [num_domains, E]
    p_cat_t  : [E, 2R]   (= concat(P_enc_w.T, P_dec_w.T, axis=1))
    pb_cat   : [1, 2R]
    w_enc_t  : [R, enc_size], wb_enc : [1, enc_size]
    w_dec_t  : [R, dec_size], wb_dec : [1, dec_size]
    returns (theta_enc [B, enc_size], theta_dec [B, dec_size])
    """
    B = d.shape[0]
    Bp = max(8, ((B + 7) // 8) * 8)            # pad batch to full sublanes
    nd, E = embed.shape
    ndp = max(8, ((nd + 7) // 8) * 8)          # pad domain axis to full sublanes
    two_r = p_cat_t.shape[1]
    R = w_enc_t.shape[0]
    enc_size = w_enc_t.shape[1]
    dec_size = w_dec_t.shape[1]
    assert two_r == 2 * R

    # Pad ids with a valid index (0); padded rows are computed then dropped.
    ids = jnp.zeros((Bp, 1), jnp.int32).at[:B, 0].set(d.astype(jnp.int32))
    if ndp != nd:
        embed = jnp.pad(embed, ((0, ndp - nd), (0, 0)))

    def fullspec(shape):
        return pl.BlockSpec(shape, lambda i: (0, 0))

    enc, dec = pl.pallas_call(
        _cpg_kernel,
        out_shape=(jax.ShapeDtypeStruct((Bp, enc_size), jnp.float32),
                   jax.ShapeDtypeStruct((Bp, dec_size), jnp.float32)),
        grid=(1,),
        in_specs=[
            fullspec((Bp, 1)),          # ids
            fullspec((ndp, E)),         # embedding table
            fullspec((E, two_r)),       # fused P
            fullspec((1, two_r)),       # fused P bias
            fullspec((R, enc_size)),
            fullspec((1, enc_size)),
            fullspec((R, dec_size)),
            fullspec((1, dec_size)),
        ],
        out_specs=[
            fullspec((Bp, enc_size)),
            fullspec((Bp, dec_size)),
        ],
        compiler_params=pltpu.CompilerParams(
            dimension_semantics=("arbitrary",)),
    )(ids, embed, p_cat_t, pb_cat, w_enc_t, wb_enc, w_dec_t, wb_dec)

    return enc[:B], dec[:B]


class CPGPallas:
    """JAX/Pallas re-implementation of the PyTorch CPG module."""

    def __init__(self, opt, key):
        self.num_domains = opt["num_domains"]
        self.E = opt["domain_embed_size"]
        self.R = opt["relevant_information_size"]
        self.enc_size = opt["encoder_rnn_param_size"]
        self.dec_size = opt["decoder_rnn_param_size"]

        ks = jax.random.split(key, 9)
        scale = 0.02
        # PyTorch-layout parameters (kept for the reference computation).
        self.embed = scale * jax.random.normal(
            ks[0], (self.num_domains, self.E), jnp.float32)
        self.P_enc_w = scale * jax.random.normal(ks[1], (self.R, self.E), jnp.float32)
        self.P_enc_b = scale * jax.random.normal(ks[2], (1, self.R), jnp.float32)
        self.W_enc_w = scale * jax.random.normal(ks[3], (self.enc_size, self.R), jnp.float32)
        self.W_enc_b = scale * jax.random.normal(ks[4], (1, self.enc_size), jnp.float32)
        self.P_dec_w = scale * jax.random.normal(ks[5], (self.R, self.E), jnp.float32)
        self.P_dec_b = scale * jax.random.normal(ks[6], (1, self.R), jnp.float32)
        self.W_dec_w = scale * jax.random.normal(ks[7], (self.dec_size, self.R), jnp.float32)
        self.W_dec_b = scale * jax.random.normal(ks[8], (1, self.dec_size), jnp.float32)

        # Kernel-layout parameters, derived ONCE at init:
        #  - transposed to [in, out] so the kernel never transposes,
        #  - P_enc / P_dec fused along the output axis -> lane-dense [E, 2R].
        self.P_cat_t = jnp.concatenate([self.P_enc_w.T, self.P_dec_w.T], axis=1)  # [E, 2R]
        self.Pb_cat = jnp.concatenate([self.P_enc_b, self.P_dec_b], axis=1)       # [1, 2R]
        self.W_enc_t = self.W_enc_w.T                                             # [R, enc]
        self.W_dec_t = self.W_dec_w.T                                             # [R, dec]

    def __call__(self, d):
        assert d.ndim == 1
        return cpg_forward(d, self.embed,
                           self.P_cat_t, self.Pb_cat,
                           self.W_enc_t, self.W_enc_b,
                           self.W_dec_t, self.W_dec_b)


def _reference(cpg, d):
    """Pure-JAX reference (PyTorch-layout weights) for correctness check."""
    x = cpg.embed[d]
    h_e = x @ cpg.P_enc_w.T + cpg.P_enc_b
    te = h_e @ cpg.W_enc_w.T + cpg.W_enc_b
    h_d = x @ cpg.P_dec_w.T + cpg.P_dec_b
    td = h_d @ cpg.W_dec_w.T + cpg.W_dec_b
    return te, td


if __name__ == "__main__":
    opt = {
        "num_domains": 8,
        "domain_embed_size": 32,
        "relevant_information_size": 64,   # 2R = 128 -> lane-dense fused projection
        "encoder_rnn_param_size": 256,
        "decoder_rnn_param_size": 384,
    }
    key = jax.random.PRNGKey(0)
    k_params, k_d = jax.random.split(key)
    cpg = CPGPallas(opt, k_params)

    # Batch of 2 domain ids (d is a 1-D LongTensor in the PyTorch module).
    d = jax.random.randint(k_d, (2,), 0, opt["num_domains"], dtype=jnp.int32)

    theta_enc, theta_dec = cpg(d)
    theta_enc = jax.block_until_ready(theta_enc)
    theta_dec = jax.block_until_ready(theta_dec)

    ref_enc, ref_dec = _reference(cpg, d)
    assert theta_enc.shape == (2, opt["encoder_rnn_param_size"])
    assert theta_dec.shape == (2, opt["decoder_rnn_param_size"])
    assert jnp.allclose(theta_enc, ref_enc, atol=1e-5, rtol=1e-5)
    assert jnp.allclose(theta_dec, ref_dec, atol=1e-5, rtol=1e-5)

    print("KERNEL_OK")
</pallas_src>

<mosaic_0001>
module attributes {stable_mosaic.version = 11 : i64} {
  func.func @_cpg_kernel(%arg0: i32, %arg1: memref<8x1xi32, #tpu.memory_space<vmem>>, %arg2: memref<8x32xf32, #tpu.memory_space<vmem>>, %arg3: memref<32x128xf32, #tpu.memory_space<vmem>>, %arg4: memref<1x128xf32, #tpu.memory_space<vmem>>, %arg5: memref<64x256xf32, #tpu.memory_space<vmem>>, %arg6: memref<1x256xf32, #tpu.memory_space<vmem>>, %arg7: memref<64x384xf32, #tpu.memory_space<vmem>>, %arg8: memref<1x384xf32, #tpu.memory_space<vmem>>, %arg9: memref<8x256xf32, #tpu.memory_space<vmem>>, %arg10: memref<8x384xf32, #tpu.memory_space<vmem>>) attributes {dimension_semantics = [#tpu.dimension_semantics<arbitrary>], iteration_bounds = array<i64: 1>, scalar_prefetch = 0 : i64, scratch_operands = 0 : i64, tpu.core_type = #tpu.core_type<tc>, window_params = [{pipeline_mode = #tpu.pipeline_mode<synchronous>, transform_indices = @transform_0, window_bounds = array<i64: 8, 1>}, {pipeline_mode = #tpu.pipeline_mode<synchronous>, transform_indices = @transform_1, window_bounds = array<i64: 8, 32>}, {pipeline_mode = #tpu.pipeline_mode<synchronous>, transform_indices = @transform_2, window_bounds = array<i64: 32, 128>}, {pipeline_mode = #tpu.pipeline_mode<synchronous>, transform_indices = @transform_3, window_bounds = array<i64: 1, 128>}, {pipeline_mode = #tpu.pipeline_mode<synchronous>, transform_indices = @transform_4, window_bounds = array<i64: 64, 256>}, {pipeline_mode = #tpu.pipeline_mode<synchronous>, transform_indices = @transform_5, window_bounds = array<i64: 1, 256>}, {pipeline_mode = #tpu.pipeline_mode<synchronous>, transform_indices = @transform_6, window_bounds = array<i64: 64, 384>}, {pipeline_mode = #tpu.pipeline_mode<synchronous>, transform_indices = @transform_7, window_bounds = array<i64: 1, 384>}, {pipeline_mode = #tpu.pipeline_mode<synchronous>, transform_indices = @transform_8, window_bounds = array<i64: 8, 256>}, {pipeline_mode = #tpu.pipeline_mode<synchronous>, transform_indices = @transform_9, window_bounds = array<i64: 8, 384>}]} {
    %c0 = arith.constant 0 : index
    %c0_0 = arith.constant 0 : index
    %0 = vector.load %arg1[%c0, %c0_0] : memref<8x1xi32, #tpu.memory_space<vmem>>, vector<8x1xi32>
    %1 = tpu.iota {dimensions = array<i32: 1>} : vector<8x8xi32>
    %2 = vector.broadcast %0 : vector<8x1xi32> to vector<8x8xi32>
    %3 = arith.cmpi eq, %1, %2 : vector<8x8xi32>
    %4 = arith.extui %3 : vector<8x8xi1> to vector<8x8xi32>
    %5 = arith.sitofp %4 : vector<8x8xi32> to vector<8x8xf32>
    %c0_1 = arith.constant 0 : index
    %c0_2 = arith.constant 0 : index
    %6 = vector.load %arg2[%c0_1, %c0_2] : memref<8x32xf32, #tpu.memory_space<vmem>>, vector<8x32xf32>
    %cst = arith.constant dense<0.000000e+00> : vector<8x32xf32>
    %7 = tpu.matmul %5, %6, %cst {dimension_numbers = #tpu.dot_dimension_numbers<[1], [0], [0], [1], [0, 0, 1, 1], [], []>} : vector<8x8xf32>, vector<8x32xf32>, vector<8x32xf32> -> vector<8x32xf32>
    %c0_3 = arith.constant 0 : index
    %c0_4 = arith.constant 0 : index
    %8 = vector.load %arg3[%c0_3, %c0_4] : memref<32x128xf32, #tpu.memory_space<vmem>>, vector<32x128xf32>
    %cst_5 = arith.constant dense<0.000000e+00> : vector<8x128xf32>
    %9 = tpu.matmul %7, %8, %cst_5 {dimension_numbers = #tpu.dot_dimension_numbers<[1], [0], [0], [1], [0, 0, 1, 1], [], []>} : vector<8x32xf32>, vector<32x128xf32>, vector<8x128xf32> -> vector<8x128xf32>
    %c0_6 = arith.constant 0 : index
    %c0_7 = arith.constant 0 : index
    %10 = vector.load %arg4[%c0_6, %c0_7] : memref<1x128xf32, #tpu.memory_space<vmem>>, vector<1x128xf32>
    %11 = vector.broadcast %10 : vector<1x128xf32> to vector<8x128xf32>
    %12 = arith.addf %9, %11 : vector<8x128xf32>
    %13 = vector.extract_strided_slice %12 {offsets = [0, 0], sizes = [8, 64], strides = [1, 1]} : vector<8x128xf32> to vector<8x64xf32>
    %14 = vector.extract_strided_slice %12 {offsets = [0, 64], sizes = [8, 64], strides = [1, 1]} : vector<8x128xf32> to vector<8x64xf32>
    %c0_8 = arith.constant 0 : index
    %c0_9 = arith.constant 0 : index
    %15 = vector.load %arg5[%c0_8, %c0_9] : memref<64x256xf32, #tpu.memory_space<vmem>>, vector<64x256xf32>
    %cst_10 = arith.constant dense<0.000000e+00> : vector<8x256xf32>
    %16 = tpu.matmul %13, %15, %cst_10 {dimension_numbers = #tpu.dot_dimension_numbers<[1], [0], [0], [1], [0, 0, 1, 1], [], []>} : vector<8x64xf32>, vector<64x256xf32>, vector<8x256xf32> -> vector<8x256xf32>
    %c0_11 = arith.constant 0 : index
    %c0_12 = arith.constant 0 : index
    %17 = vector.load %arg6[%c0_11, %c0_12] : memref<1x256xf32, #tpu.memory_space<vmem>>, vector<1x256xf32>
    %18 = vector.broadcast %17 : vector<1x256xf32> to vector<8x256xf32>
    %19 = arith.addf %16, %18 : vector<8x256xf32>
    %c0_13 = arith.constant 0 : index
    %c0_14 = arith.constant 0 : index
    %20 = vector.load %arg9[%c0_13, %c0_14] : memref<8x256xf32, #tpu.memory_space<vmem>>, vector<8x256xf32>
    tpu.vector_store %arg9[%c0_13, %c0_14], %19 {strides = array<i32>} : memref<8x256xf32, #tpu.memory_space<vmem>>, vector<8x256xf32>,
    %c0_15 = arith.constant 0 : index
    %c0_16 = arith.constant 0 : index
    %21 = vector.load %arg7[%c0_15, %c0_16] : memref<64x384xf32, #tpu.memory_space<vmem>>, vector<64x384xf32>
    %cst_17 = arith.constant dense<0.000000e+00> : vector<8x384xf32>
    %22 = tpu.matmul %14, %21, %cst_17 {dimension_numbers = #tpu.dot_dimension_numbers<[1], [0], [0], [1], [0, 0, 1, 1], [], []>} : vector<8x64xf32>, vector<64x384xf32>, vector<8x384xf32> -> vector<8x384xf32>
    %c0_18 = arith.constant 0 : index
    %c0_19 = arith.constant 0 : index
    %23 = vector.load %arg8[%c0_18, %c0_19] : memref<1x384xf32, #tpu.memory_space<vmem>>, vector<1x384xf32>
    %24 = vector.broadcast %23 : vector<1x384xf32> to vector<8x384xf32>
    %25 = arith.addf %22, %24 : vector<8x384xf32>
    %c0_20 = arith.constant 0 : index
    %c0_21 = arith.constant 0 : index
    %26 = vector.load %arg10[%c0_20, %c0_21] : memref<8x384xf32, #tpu.memory_space<vmem>>, vector<8x384xf32>
    tpu.vector_store %arg10[%c0_20, %c0_21], %25 {strides = array<i32>} : memref<8x384xf32, #tpu.memory_space<vmem>>, vector<8x384xf32>,
    return
  }
  func.func @transform_0(%arg0: i32) -> (i32, i32) {
    %c0_i32 = arith.constant 0 : i32
    %c0_i32_0 = arith.constant 0 : i32
    %c0_i32_1 = arith.constant 0 : i32
    return %c0_i32, %c0_i32_0 : i32, i32
  }
  func.func @transform_1(%arg0: i32) -> (i32, i32) {
    %c0_i32 = arith.constant 0 : i32
    %c0_i32_0 = arith.constant 0 : i32
    %c0_i32_1 = arith.constant 0 : i32
    return %c0_i32, %c0_i32_0 : i32, i32
  }
  func.func @transform_2(%arg0: i32) -> (i32, i32) {
    %c0_i32 = arith.constant 0 : i32
    %c0_i32_0 = arith.constant 0 : i32
    %c0_i32_1 = arith.constant 0 : i32
    return %c0_i32, %c0_i32_0 : i32, i32
  }
  func.func @transform_3(%arg0: i32) -> (i32, i32) {
    %c0_i32 = arith.constant 0 : i32
    %c0_i32_0 = arith.constant 0 : i32
    %c0_i32_1 = arith.constant 0 : i32
    return %c0_i32, %c0_i32_0 : i32, i32
  }
  func.func @transform_4(%arg0: i32) -> (i32, i32) {
    %c0_i32 = arith.constant 0 : i32
    %c0_i32_0 = arith.constant 0 : i32
    %c0_i32_1 = arith.constant 0 : i32
    return %c0_i32, %c0_i32_0 : i32, i32
  }
  func.func @transform_5(%arg0: i32) -> (i32, i32) {
    %c0_i32 = arith.constant 0 : i32
    %c0_i32_0 = arith.constant 0 : i32
    %c0_i32_1 = arith.constant 0 : i32
    return %c0_i32, %c0_i32_0 : i32, i32
  }
  func.func @transform_6(%arg0: i32) -> (i32, i32) {
    %c0_i32 = arith.constant 0 : i32
    %c0_i32_0 = arith.constant 0 : i32
    %c0_i32_1 = arith.constant 0 : i32
    return %c0_i32, %c0_i32_0 : i32, i32
  }
  func.func @transform_7(%arg0: i32) -> (i32, i32) {
    %c0_i32 = arith.constant 0 : i32
    %c0_i32_0 = arith.constant 0 : i32
    %c0_i32_1 = arith.constant 0 : i32
    return %c0_i32, %c0_i32_0 : i32, i32
  }
  func.func @transform_8(%arg0: i32) -> (i32, i32) {
    %c0_i32 = arith.constant 0 : i32
    %c0_i32_0 = arith.constant 0 : i32
    %c0_i32_1 = arith.constant 0 : i32
    return %c0_i32, %c0_i32_0 : i32, i32
  }
  func.func @transform_9(%arg0: i32) -> (i32, i32) {
    %c0_i32 = arith.constant 0 : i32
    %c0_i32_0 = arith.constant 0 : i32
    %c0_i32_1 = arith.constant 0 : i32
    return %c0_i32, %c0_i32_0 : i32, i32
  }
}

</mosaic_0001>

<llo_original>
// kernel: tpu_custom_call.1
$region0: #{tpu_custom_call.1}
  #allocation0 [shape = 'u32[]', space=smem, size = 0x4, offset = 0x4, fixed_abs, tag = 'smem constant byte address 0x4 - core index']
  #allocation1 [shape = 'u32[144,128]{1,0:T(1,128)}', space=vmem, size = 0x12000, scoped, tag = 'internal scratch']
  %s0 = inlined_call_operand.vmem [shape: s32[8,1], index: 0, kind: input, shape index: {}]
  %s1 = inlined_call_operand.vmem [shape: f32[8,32], index: 1, kind: input, shape index: {}]
  %s2 = inlined_call_operand.hbm [shape: f32[32,128], index: 2, kind: input, shape index: {}]
  %s3 = inlined_call_operand.vmem [shape: f32[1,128], index: 3, kind: input, shape index: {}]
  %s4 = inlined_call_operand.hbm [shape: f32[64,256], index: 4, kind: input, shape index: {}]
  %s5 = inlined_call_operand.vmem [shape: f32[1,256], index: 5, kind: input, shape index: {}]
  %s6 = inlined_call_operand.hbm [shape: f32[64,384], index: 6, kind: input, shape index: {}]
  %s7 = inlined_call_operand.vmem [shape: f32[1,384], index: 7, kind: input, shape index: {}]
  %s8 = inlined_call_operand.hbm [shape: f32[8,256], index: 8, kind: output, shape index: {0}]
  %s9 = inlined_call_operand.hbm [shape: f32[8,384], index: 9, kind: output, shape index: {1}]
  %10 = xla_tuple %s8, %s9
  %s11 = sld [smem:[#allocation0]]
  $region62: #{tpu_custom_call.1} parent=0
    _
  %s13 = ssub.s32 1, %s11
  %s14 = scalar_select 0, %s13, %s11
  $region1: #{tpu_custom_call.1} parent=0
    #allocation2 [shape = 'u8[16384]{0}', space=vmem, size = 0x4000, scoped, tag = 'input window, operand 2, single buffered']
    #allocation3 [shape = 's32[1]{0}', space=sflag, size = 0x4, scoped, tag = 'scoped memory for tpu_custom_call.1']
    #allocation4 [shape = 's32[1]{0}', space=sflag, size = 0x4, scoped, tag = 'scoped memory for tpu_custom_call.1']
    #allocation5 [shape = 'u8[65536]{0}', space=vmem, size = 0x10000, scoped, tag = 'input window, operand 4, single buffered']
    #allocation6 [shape = 's32[1]{0}', space=sflag, size = 0x4, scoped, tag = 'scoped memory for tpu_custom_call.1']
    #allocation7 [shape = 'u8[98304]{0}', space=vmem, size = 0x18000, scoped, tag = 'input window, operand 6, single buffered']
    #allocation8 [shape = 'u8[8192]{0}', space=vmem, size = 0x2000, scoped, tag = 'output window, operand 0, single buffered']
    #allocation9 [shape = 'u8[12288]{0}', space=vmem, size = 0x3000, scoped, tag = 'output window, operand 1, single buffered']
    #allocation10 [shape = 's32[1]{0}', space=sflag, size = 0x4, scoped, tag = 'scoped memory for tpu_custom_call.1']
    %15 = vsyncpa [#allocation3], 0
    %16 = vsyncpa [#allocation6], 0
    %17 = vsyncpa [#allocation4], 0
    %18 = vsyncpa [#allocation10], 0
    // Predicated region
    $region2: #{tpu_custom_call.1} parent=1 // pred_check
      _
    $region3: #{tpu_custom_call.1} parent=1 // pred_check_branch
      %20 = sbr.rel (0) target = $region5
    $region4: #{tpu_custom_call.1} parent=1 // pred_region
      _
    $region5: #{tpu_custom_call.1} parent=1 // pred_fallthru
      _
    // Predicated region
    $region6: #{tpu_custom_call.1} parent=1 // pred_check
      _
    $region7: #{tpu_custom_call.1} parent=1 // pred_check_branch
      %22 = sbr.rel (0) target = $region9
    $region8: #{tpu_custom_call.1} parent=1 // pred_region
      _
    $region9: #{tpu_custom_call.1} parent=1 // pred_fallthru
      _
    // Predicated region
    $region10: #{tpu_custom_call.1} parent=1 // pred_check
      _
    $region11: #{tpu_custom_call.1} parent=1 // pred_check_branch
      %24 = sbr.rel (0) target = $region13
    $region12: #{tpu_custom_call.1} parent=1 // pred_region
      %s26 = ssub.s32 512, 512
      %27 = vsyncadd [#allocation3], %s26
      %s28 = sshll.u32 [#allocation2], 4
      %s29 = int_to_ptr.vmem [resolvable:$true] %s28
      %34 = dma.hbm_to_vmem [thread:$0]  %s2, 512, %s29, [#allocation3], 128, 128, 8
    $region13: #{tpu_custom_call.1} parent=1 // pred_fallthru
      _
    // Predicated region
    $region14: #{tpu_custom_call.1} parent=1 // pred_check
      _
    $region15: #{tpu_custom_call.1} parent=1 // pred_check_branch
      %36 = sbr.rel (0) target = $region17
    $region16: #{tpu_custom_call.1} parent=1 // pred_region
      _
    $region17: #{tpu_custom_call.1} parent=1 // pred_fallthru
      _
    // Predicated region
    $region18: #{tpu_custom_call.1} parent=1 // pred_check
      _
    $region19: #{tpu_custom_call.1} parent=1 // pred_check_branch
      %38 = sbr.rel (0) target = $region21
    $region20: #{tpu_custom_call.1} parent=1 // pred_region
      %s40 = ssub.s32 2048, 2048
      %41 = vsyncadd [#allocation6], %s40
      %s42 = sshll.u32 [#allocation5], 4
      %s43 = int_to_ptr.vmem [resolvable:$true] %s42
      %48 = dma.hbm_to_vmem [thread:$0]  %s4, 2048, %s43, [#allocation6], 256, 256, 16
    $region21: #{tpu_custom_call.1} parent=1 // pred_fallthru
      _
    // Predicated region
    $region22: #{tpu_custom_call.1} parent=1 // pred_check
      _
    $region23: #{tpu_custom_call.1} parent=1 // pred_check_branch
      %50 = sbr.rel (0) target = $region25
    $region24: #{tpu_custom_call.1} parent=1 // pred_region
      _
    $region25: #{tpu_custom_call.1} parent=1 // pred_fallthru
      _
    // Predicated region
    $region26: #{tpu_custom_call.1} parent=1 // pred_check
      _
    $region27: #{tpu_custom_call.1} parent=1 // pred_check_branch
      %52 = sbr.rel (0) target = $region29
    $region28: #{tpu_custom_call.1} parent=1 // pred_region
      %s54 = ssub.s32 3072, 3072
      %55 = vsyncadd [#allocation6], %s54
      %s56 = sshll.u32 [#allocation7], 4
      %s57 = int_to_ptr.vmem [resolvable:$true] %s56
      %62 = dma.hbm_to_vmem [thread:$0]  %s6, 3072, %s57, [#allocation6], 384, 384, 24
    $region29: #{tpu_custom_call.1} parent=1 // pred_fallthru
      _
    // Predicated region
    $region30: #{tpu_custom_call.1} parent=1 // pred_check
      _
    $region31: #{tpu_custom_call.1} parent=1 // pred_check_branch
      %64 = sbr.rel (0) target = $region33
    $region32: #{tpu_custom_call.1} parent=1 // pred_region
      _
    $region33: #{tpu_custom_call.1} parent=1 // pred_fallthru
      _
    // Predicated region
    $region34: #{tpu_custom_call.1} parent=1 // pred_check
      _
    $region35: #{tpu_custom_call.1} parent=1 // pred_check_branch
      %66 = sbr.rel (0) target = $region37
    $region36: #{tpu_custom_call.1} parent=1 // pred_region
      %67 = dma.done [#allocation3], 512
    $region37: #{tpu_custom_call.1} parent=1 // pred_fallthru
      _
    // Predicated region
    $region38: #{tpu_custom_call.1} parent=1 // pred_check
      _
    $region39: #{tpu_custom_call.1} parent=1 // pred_check_branch
      %69 = sbr.rel (0) target = $region41
    $region40: #{tpu_custom_call.1} parent=1 // pred_region
      %70 = dma.done [#allocation6], 2048
    $region41: #{tpu_custom_call.1} parent=1 // pred_fallthru
      _
    // Predicated region
    $region42: #{tpu_custom_call.1} parent=1 // pred_check
      _
    $region43: #{tpu_custom_call.1} parent=1 // pred_check_branch
      %72 = sbr.rel (0) target = $region45
    $region44: #{tpu_custom_call.1} parent=1 // pred_region
      %73 = dma.done [#allocation6], 3072
    $region45: #{tpu_custom_call.1} parent=1 // pred_fallthru
      _
    %v74 = vld [vmem:[%s0] sm:$0xff]
    %v75 = vlaneseq
    %v76 = vand.u32 %v75, 127
    %77 = vset.pattern.permute.xlu0 0
    %78 = vperm.xlu0 %77, %v74
    %v79 = vpop.permute.xlu0 %78
    %vm80 = vcmp.eq.s32.totalorder %v76, %v79
    %v81 = vsel %vm80, 1, 0
    %v82 = vcvt.s32.f32 %v81
    %v83 = vld [vmem:[%s1] sm:$0xff]
    %vm84 = vcmask 64512
    %v86 = vsel %vm84, %v82, 0
    %88 = vmatprep.subr.mxu0 0.0
    %89 = vmatpush1.msra.mxu0 %v83
    %90 = vmatprep.subr.mxu0 0.0
    %91 = vmatpush1.msra.mxu0 0.0
    %92 = vmatprep.subr.mxu0 0.0
    %93 = vmatpush1.msra.mxu0 0.0
    %94 = vmatprep.subr.mxu0 0.0
    %95 = vmatpush1.msra.mxu0 0.0
    %96 = vmatprep.subr.mxu0 0.0
    %97 = vmatpush1.msra.mxu0 0.0
    %98 = vmatprep.subr.mxu0 0.0
    %99 = vmatpush1.msra.mxu0 0.0
    %100 = vmatprep.subr.mxu0 0.0
    %101 = vmatpush1.msra.mxu0 0.0
    %102 = vmatprep.subr.mxu0 0.0
    %103 = vmatpush1.msra.mxu0 0.0
    %104 = vmatprep.subr.mxu0 0.0
    %105 = vmatpush1.msra.mxu0 0.0
    %106 = vmatprep.subr.mxu0 0.0
    %107 = vmatpush1.msra.mxu0 0.0
    %108 = vmatprep.subr.mxu0 0.0
    %109 = vmatpush1.msra.mxu0 0.0
    %110 = vmatprep.subr.mxu0 0.0
    %111 = vmatpush1.msra.mxu0 0.0
    %112 = vmatprep.subr.mxu0 0.0
    %113 = vmatpush1.msra.mxu0 0.0
    %114 = vmatprep.subr.mxu0 0.0
    %115 = vmatpush1.msra.mxu0 0.0
    %116 = vmatprep.subr.mxu0 0.0
    %117 = vmatpush1.msra.mxu0 0.0
    %118 = vmatprep.subr.mxu0 0.0
    %119 = vmatpush1.msra.mxu0 0.0
    %120 = vmatprep.subr.mxu0 0.0
    %121 = vmatpush1.msra.mxu0 0.0
    %122 = vmatprep.subr.mxu0 0.0
    %123 = vmatpush1.msra.mxu0 0.0
    %124 = vmatprep.subr.mxu0 0.0
    %125 = vmatpush1.msra.mxu0 0.0
    %126 = vmatprep.subr.mxu0 0.0
    %127 = vmatpush1.msra.mxu0 0.0
    %128 = vmatprep.subr.mxu0 0.0
    %129 = vmatpush1.msra.mxu0 0.0
    %130 = vmatprep.subr.mxu0 0.0
    %131 = vmatpush1.msra.mxu0 0.0
    %132 = vmatprep.subr.mxu0 0.0
    %133 = vmatpush1.msra.mxu0 0.0
    %134 = vmatprep.subr.mxu0 0.0
    %135 = vmatpush1.msra.mxu0 0.0
    %136 = vmatprep.subr.mxu0 0.0
    %137 = vmatpush1.msra.mxu0 0.0
    %138 = vmatprep.subr.mxu0 0.0
    %139 = vmatpush1.msra.mxu0 0.0
    %140 = vmatprep.subr.mxu0 0.0
    %141 = vmatpush1.msra.mxu0 0.0
    %142 = vmatprep.subr.mxu0 0.0
    %143 = vmatpush1.msra.mxu0 0.0
    %144 = vmatprep.subr.mxu0 0.0
    %145 = vmatpush1.msra.mxu0 0.0
    %146 = vmatprep.subr.mxu0 0.0
    %147 = vmatpush1.msra.mxu0 0.0
    %148 = vmatprep.subr.mxu0 0.0
    %149 = vmatpush1.msra.mxu0 0.0
    %150 = vmatprep.subr.mxu0 0.0
    %151 = vmatpush1.msra.mxu0 0.0
    %152 = vmatprep.mubr.f32.mxu0 0.0
    %153 = vmatmul.mubr.f32.gmra.mrb[0].mxu0 %v86
    %v154 = vpop.f32.mrb[0].mxu0
    %v155 = vadd.f32 0.0, %v154
    %v156 = vpop.f32.mrb[0].mxu0
    %157 = vdwg.mxu0
    %v158 = vld [vmem:[#allocation2] sm:$0xff]
    %v159 = vld [vmem:[#allocation2 + $0x8] sm:$0xff]
    %v160 = vld [vmem:[#allocation2 + $0x10] sm:$0xff]
    %v161 = vld [vmem:[#allocation2 + $0x18] sm:$0xff]
    %v162 = vld [vmem:[%s3] sm:$0x1]
    %v164 = vlaneseq
    %v165 = vshrl.u32 %v164, 7
    %v166 = vsub.s32 0, %v165
    %v167 = vrot.slane %v162, %v166
    %vm169 = vcmask 261120
    %v171 = vsel %vm169, %v155, 0
    %173 = vmatprep.subr.mxu0 0.0
    %174 = vmatpush1.msra.mxu0 %v158
    %175 = vmatprep.subr.mxu0 0.0
    %176 = vmatpush1.msra.mxu0 %v159
    %177 = vmatprep.subr.mxu0 0.0
    %178 = vmatpush1.msra.mxu0 %v160
    %179 = vmatprep.subr.mxu0 0.0
    %180 = vmatpush1.msra.mxu0 %v161
    %181 = vmatprep.subr.mxu0 0.0
    %182 = vmatpush1.msra.mxu0 0.0
    %183 = vmatprep.subr.mxu0 0.0
    %184 = vmatpush1.msra.mxu0 0.0
    %185 = vmatprep.subr.mxu0 0.0
    %186 = vmatpush1.msra.mxu0 0.0
    %187 = vmatprep.subr.mxu0 0.0
    %188 = vmatpush1.msra.mxu0 0.0
    %189 = vmatprep.subr.mxu0 0.0
    %190 = vmatpush1.msra.mxu0 0.0
    %191 = vmatprep.subr.mxu0 0.0
    %192 = vmatpush1.msra.mxu0 0.0
    %193 = vmatprep.subr.mxu0 0.0
    %194 = vmatpush1.msra.mxu0 0.0
    %195 = vmatprep.subr.mxu0 0.0
    %196 = vmatpush1.msra.mxu0 0.0
    %197 = vmatprep.subr.mxu0 0.0
    %198 = vmatpush1.msra.mxu0 0.0
    %199 = vmatprep.subr.mxu0 0.0
    %200 = vmatpush1.msra.mxu0 0.0
    %201 = vmatprep.subr.mxu0 0.0
    %202 = vmatpush1.msra.mxu0 0.0
    %203 = vmatprep.subr.mxu0 0.0
    %204 = vmatpush1.msra.mxu0 0.0
    %205 = vmatprep.subr.mxu0 0.0
    %206 = vmatpush1.msra.mxu0 0.0
    %207 = vmatprep.subr.mxu0 0.0
    %208 = vmatpush1.msra.mxu0 0.0
    %209 = vmatprep.subr.mxu0 0.0
    %210 = vmatpush1.msra.mxu0 0.0
    %211 = vmatprep.subr.mxu0 0.0
    %212 = vmatpush1.msra.mxu0 0.0
    %213 = vmatprep.subr.mxu0 0.0
    %214 = vmatpush1.msra.mxu0 0.0
    %215 = vmatprep.subr.mxu0 0.0
    %216 = vmatpush1.msra.mxu0 0.0
    %217 = vmatprep.subr.mxu0 0.0
    %218 = vmatpush1.msra.mxu0 0.0
    %219 = vmatprep.subr.mxu0 0.0
    %220 = vmatpush1.msra.mxu0 0.0
    %221 = vmatprep.subr.mxu0 0.0
    %222 = vmatpush1.msra.mxu0 0.0
    %223 = vmatprep.subr.mxu0 0.0
    %224 = vmatpush1.msra.mxu0 0.0
    %225 = vmatprep.subr.mxu0 0.0
    %226 = vmatpush1.msra.mxu0 0.0
    %227 = vmatprep.subr.mxu0 0.0
    %228 = vmatpush1.msra.mxu0 0.0
    %229 = vmatprep.subr.mxu0 0.0
    %230 = vmatpush1.msra.mxu0 0.0
    %231 = vmatprep.subr.mxu0 0.0
    %232 = vmatpush1.msra.mxu0 0.0
    %233 = vmatprep.subr.mxu0 0.0
    %234 = vmatpush1.msra.mxu0 0.0
    %235 = vmatprep.subr.mxu0 0.0
    %236 = vmatpush1.msra.mxu0 0.0
    %237 = vmatprep.mubr.f32.mxu0 0.0
    %238 = vmatmul.mubr.f32.gmra.mrb[0].mxu0 %v171
    %v239 = vpop.f32.mrb[0].mxu0
    %v240 = vadd.f32 %v167, %v239
    %v241 = vpop.f32.mrb[0].mxu0
    %242 = vdwg.mxu0
    %v243 = vld [vmem:[#allocation5] sm:$0xff]
    %v244 = vld [vmem:[#allocation5 + $0x8] sm:$0xff]
    %v245 = vld [vmem:[#allocation5 + $0x10] sm:$0xff]
    %v246 = vld [vmem:[#allocation5 + $0x18] sm:$0xff]
    %v247 = vld [vmem:[#allocation5 + $0x20] sm:$0xff]
    %v248 = vld [vmem:[#allocation5 + $0x28] sm:$0xff]
    %v249 = vld [vmem:[#allocation5 + $0x30] sm:$0xff]
    %v250 = vld [vmem:[#allocation5 + $0x38] sm:$0xff]
    %v251 = vld [vmem:[#allocation5 + $0x40] sm:$0xff]
    %v252 = vld [vmem:[#allocation5 + $0x48] sm:$0xff]
    %v253 = vld [vmem:[#allocation5 + $0x50] sm:$0xff]
    %v254 = vld [vmem:[#allocation5 + $0x58] sm:$0xff]
    %v255 = vld [vmem:[#allocation5 + $0x60] sm:$0xff]
    %v256 = vld [vmem:[#allocation5 + $0x68] sm:$0xff]
    %v257 = vld [vmem:[#allocation5 + $0x70] sm:$0xff]
    %v258 = vld [vmem:[#allocation5 + $0x78] sm:$0xff]
    %v259 = vld [vmem:[%s5] sm:$0x3]
    %v261 = vlaneseq
    %v262 = vshrl.u32 %v261, 7
    %v263 = vsub.s32 0, %v262
    %v264 = vrot.slane %v259, %v263
    %v265 = vlaneseq
    %v266 = vshrl.u32 %v265, 7
    %v267 = vsub.s32 1, %v266
    %v268 = vrot.slane %v259, %v267
    %vm271 = vcmask 523264
    %v273 = vsel %vm271, %v240, 0
    %275 = vmatprep.subr.mxu0 %v244
    %276 = vmatpush1.msra.mxu0 %v243
    %277 = vmatprep.subr.mxu0 %v246
    %278 = vmatpush1.msra.mxu0 %v245
    %279 = vmatprep.subr.mxu0 %v248
    %280 = vmatpush1.msra.mxu0 %v247
    %281 = vmatprep.subr.mxu0 %v250
    %282 = vmatpush1.msra.mxu0 %v249
    %283 = vmatprep.subr.mxu0 %v252
    %284 = vmatpush1.msra.mxu0 %v251
    %285 = vmatprep.subr.mxu0 %v254
    %286 = vmatpush1.msra.mxu0 %v253
    %287 = vmatprep.subr.mxu0 %v256
    %288 = vmatpush1.msra.mxu0 %v255
    %289 = vmatprep.subr.mxu0 %v258
    %290 = vmatpush1.msra.mxu0 %v257
    %291 = vmatprep.subr.mxu0 0.0
    %292 = vmatpush1.msra.mxu0 0.0
    %293 = vmatprep.subr.mxu0 0.0
    %294 = vmatpush1.msra.mxu0 0.0
    %295 = vmatprep.subr.mxu0 0.0
    %296 = vmatpush1.msra.mxu0 0.0
    %297 = vmatprep.subr.mxu0 0.0
    %298 = vmatpush1.msra.mxu0 0.0
    %299 = vmatprep.subr.mxu0 0.0
    %300 = vmatpush1.msra.mxu0 0.0
    %301 = vmatprep.subr.mxu0 0.0
    %302 = vmatpush1.msra.mxu0 0.0
    %303 = vmatprep.subr.mxu0 0.0
    %304 = vmatpush1.msra.mxu0 0.0
    %305 = vmatprep.subr.mxu0 0.0
    %306 = vmatpush1.msra.mxu0 0.0
    %307 = vmatprep.subr.mxu0 0.0
    %308 = vmatpush1.msra.mxu0 0.0
    %309 = vmatprep.subr.mxu0 0.0
    %310 = vmatpush1.msra.mxu0 0.0
    %311 = vmatprep.subr.mxu0 0.0
    %312 = vmatpush1.msra.mxu0 0.0
    %313 = vmatprep.subr.mxu0 0.0
    %314 = vmatpush1.msra.mxu0 0.0
    %315 = vmatprep.subr.mxu0 0.0
    %316 = vmatpush1.msra.mxu0 0.0
    %317 = vmatprep.subr.mxu0 0.0
    %318 = vmatpush1.msra.mxu0 0.0
    %319 = vmatprep.subr.mxu0 0.0
    %320 = vmatpush1.msra.mxu0 0.0
    %321 = vmatprep.subr.mxu0 0.0
    %322 = vmatpush1.msra.mxu0 0.0
    %323 = vmatprep.subr.mxu0 0.0
    %324 = vmatpush1.msra.mxu0 0.0
    %325 = vmatprep.subr.mxu0 0.0
    %326 = vmatpush1.msra.mxu0 0.0
    %327 = vmatprep.subr.mxu0 0.0
    %328 = vmatpush1.msra.mxu0 0.0
    %329 = vmatprep.subr.mxu0 0.0
    %330 = vmatpush1.msra.mxu0 0.0
    %331 = vmatprep.subr.mxu0 0.0
    %332 = vmatpush1.msra.mxu0 0.0
    %333 = vmatprep.subr.mxu0 0.0
    %334 = vmatpush1.msra.mxu0 0.0
    %335 = vmatprep.subr.mxu0 0.0
    %336 = vmatpush1.msra.mxu0 0.0
    %337 = vmatprep.subr.mxu0 0.0
    %338 = vmatpush1.msra.mxu0 0.0
    %339 = vmatprep.mubr.f32.mxu0 0.0
    %340 = vmatmul.mubr.f32.gmra.mrb[0].mxu0 %v273
    %v341 = vpop.f32.mrb[0].mxu0
    %v342 = vadd.f32 %v264, %v341
    %v343 = vpop.f32.mrb[0].mxu0
    %v344 = vadd.f32 %v268, %v343
    %345 = vdwg.mxu0
    %346 = vst [vmem:[#allocation8] sm:$0xff] %v342
    %347 = vst [vmem:[#allocation8 + $0x8] sm:$0xff] %v344
    %v348 = vld [vmem:[#allocation7] sm:$0xff]
    %v349 = vld [vmem:[#allocation7 + $0x8] sm:$0xff]
    %v350 = vld [vmem:[#allocation7 + $0x10] sm:$0xff]
    %v351 = vld [vmem:[#allocation7 + $0x18] sm:$0xff]
    %v352 = vld [vmem:[#allocation7 + $0x20] sm:$0xff]
    %v353 = vld [vmem:[#allocation7 + $0x28] sm:$0xff]
    %v354 = vld [vmem:[#allocation7 + $0x30] sm:$0xff]
    %v355 = vld [vmem:[#allocation7 + $0x38] sm:$0xff]
    %v356 = vld [vmem:[#allocation7 + $0x40] sm:$0xff]
    %v357 = vld [vmem:[#allocation7 + $0x48] sm:$0xff]
    %v358 = vld [vmem:[#allocation7 + $0x50] sm:$0xff]
    %v359 = vld [vmem:[#allocation7 + $0x58] sm:$0xff]
    %v360 = vld [vmem:[#allocation7 + $0x60] sm:$0xff]
    %v361 = vld [vmem:[#allocation7 + $0x68] sm:$0xff]
    %v362 = vld [vmem:[#allocation7 + $0x70] sm:$0xff]
    %v363 = vld [vmem:[#allocation7 + $0x78] sm:$0xff]
    %v364 = vld [vmem:[#allocation7 + $0x80] sm:$0xff]
    %v365 = vld [vmem:[#allocation7 + $0x88] sm:$0xff]
    %v366 = vld [vmem:[#allocation7 + $0x90] sm:$0xff]
    %v367 = vld [vmem:[#allocation7 + $0x98] sm:$0xff]
    %v368 = vld [vmem:[#allocation7 + $0xa0] sm:$0xff]
    %v369 = vld [vmem:[#allocation7 + $0xa8] sm:$0xff]
    %v370 = vld [vmem:[#allocation7 + $0xb0] sm:$0xff]
    %v371 = vld [vmem:[#allocation7 + $0xb8] sm:$0xff]
    %v372 = vld [vmem:[%s7] sm:$0x7]
    %v374 = vlaneseq
    %v375 = vshrl.u32 %v374, 7
    %v376 = vsub.s32 0, %v375
    %v377 = vrot.slane %v372, %v376
    %v378 = vlaneseq
    %v379 = vshrl.u32 %v378, 7
    %v380 = vsub.s32 1, %v379
    %v381 = vrot.slane %v372, %v380
    %v382 = vlaneseq
    %v383 = vshrl.u32 %v382, 7
    %v384 = vsub.s32 2, %v383
    %v385 = vrot.slane %v372, %v384
    %389 = vrot.lane.b32.xlu0 %v240, 64
    %v390 = vpop.permute.xlu0 %389
    %v391 = vsel %vm271, %v390, 0
    %393 = vmatprep.subr.mxu0 %v349
    %394 = vmatpush1.msra.mxu0 %v348
    %395 = vmatprep.subr.mxu0 %v352
    %396 = vmatpush1.msra.mxu0 %v351
    %397 = vmatprep.subr.mxu0 %v355
    %398 = vmatpush1.msra.mxu0 %v354
    %399 = vmatprep.subr.mxu0 %v358
    %400 = vmatpush1.msra.mxu0 %v357
    %401 = vmatprep.subr.mxu0 %v361
    %402 = vmatpush1.msra.mxu0 %v360
    %403 = vmatprep.subr.mxu0 %v364
    %404 = vmatpush1.msra.mxu0 %v363
    %405 = vmatprep.subr.mxu0 %v367
    %406 = vmatpush1.msra.mxu0 %v366
    %407 = vmatprep.subr.mxu0 %v370
    %408 = vmatpush1.msra.mxu0 %v369
    %409 = vmatprep.subr.mxu0 0.0
    %410 = vmatpush1.msra.mxu0 0.0
    %411 = vmatprep.subr.mxu0 0.0
    %412 = vmatpush1.msra.mxu0 0.0
    %413 = vmatprep.subr.mxu0 0.0
    %414 = vmatpush1.msra.mxu0 0.0
    %415 = vmatprep.subr.mxu0 0.0
    %416 = vmatpush1.msra.mxu0 0.0
    %417 = vmatprep.subr.mxu0 0.0
    %418 = vmatpush1.msra.mxu0 0.0
    %419 = vmatprep.subr.mxu0 0.0
    %420 = vmatpush1.msra.mxu0 0.0
    %421 = vmatprep.subr.mxu0 0.0
    %422 = vmatpush1.msra.mxu0 0.0
    %423 = vmatprep.subr.mxu0 0.0
    %424 = vmatpush1.msra.mxu0 0.0
    %425 = vmatprep.subr.mxu0 0.0
    %426 = vmatpush1.msra.mxu0 0.0
    %427 = vmatprep.subr.mxu0 0.0
    %428 = vmatpush1.msra.mxu0 0.0
    %429 = vmatprep.subr.mxu0 0.0
    %430 = vmatpush1.msra.mxu0 0.0
    %431 = vmatprep.subr.mxu0 0.0
    %432 = vmatpush1.msra.mxu0 0.0
    %433 = vmatprep.subr.mxu0 0.0
    %434 = vmatpush1.msra.mxu0 0.0
    %435 = vmatprep.subr.mxu0 0.0
    %436 = vmatpush1.msra.mxu0 0.0
    %437 = vmatprep.subr.mxu0 0.0
    %438 = vmatpush1.msra.mxu0 0.0
    %439 = vmatprep.subr.mxu0 0.0
    %440 = vmatpush1.msra.mxu0 0.0
    %441 = vmatprep.subr.mxu0 0.0
    %442 = vmatpush1.msra.mxu0 0.0
    %443 = vmatprep.subr.mxu0 0.0
    %444 = vmatpush1.msra.mxu0 0.0
    %445 = vmatprep.subr.mxu0 0.0
    %446 = vmatpush1.msra.mxu0 0.0
    %447 = vmatprep.subr.mxu0 0.0
    %448 = vmatpush1.msra.mxu0 0.0
    %449 = vmatprep.subr.mxu0 0.0
    %450 = vmatpush1.msra.mxu0 0.0
    %451 = vmatprep.subr.mxu0 0.0
    %452 = vmatpush1.msra.mxu0 0.0
    %453 = vmatprep.subr.mxu0 0.0
    %454 = vmatpush1.msra.mxu0 0.0
    %455 = vmatprep.subr.mxu0 0.0
    %456 = vmatpush1.msra.mxu0 0.0
    %457 = vmatprep.mubr.f32.mxu0 0.0
    %458 = vmatmul.mubr.f32.gmra.mrb[0].mxu0 %v391
    %v459 = vpop.f32.mrb[0].mxu0
    %v460 = vadd.f32 %v377, %v459
    %v461 = vpop.f32.mrb[0].mxu0
    %v462 = vadd.f32 %v381, %v461
    %463 = vdwg.mxu0
    %464 = vmatprep.subr.mxu0 0.0
    %465 = vmatpush1.msra.mxu0 %v350
    %466 = vmatprep.subr.mxu0 0.0
    %467 = vmatpush1.msra.mxu0 %v353
    %468 = vmatprep.subr.mxu0 0.0
    %469 = vmatpush1.msra.mxu0 %v356
    %470 = vmatprep.subr.mxu0 0.0
    %471 = vmatpush1.msra.mxu0 %v359
    %472 = vmatprep.subr.mxu0 0.0
    %473 = vmatpush1.msra.mxu0 %v362
    %474 = vmatprep.subr.mxu0 0.0
    %475 = vmatpush1.msra.mxu0 %v365
    %476 = vmatprep.subr.mxu0 0.0
    %477 = vmatpush1.msra.mxu0 %v368
    %478 = vmatprep.subr.mxu0 0.0
    %479 = vmatpush1.msra.mxu0 %v371
    %480 = vmatprep.subr.mxu0 0.0
    %481 = vmatpush1.msra.mxu0 0.0
    %482 = vmatprep.subr.mxu0 0.0
    %483 = vmatpush1.msra.mxu0 0.0
    %484 = vmatprep.subr.mxu0 0.0
    %485 = vmatpush1.msra.mxu0 0.0
    %486 = vmatprep.subr.mxu0 0.0
    %487 = vmatpush1.msra.mxu0 0.0
    %488 = vmatprep.subr.mxu0 0.0
    %489 = vmatpush1.msra.mxu0 0.0
    %490 = vmatprep.subr.mxu0 0.0
    %491 = vmatpush1.msra.mxu0 0.0
    %492 = vmatprep.subr.mxu0 0.0
    %493 = vmatpush1.msra.mxu0 0.0
    %494 = vmatprep.subr.mxu0 0.0
    %495 = vmatpush1.msra.mxu0 0.0
    %496 = vmatprep.subr.mxu0 0.0
    %497 = vmatpush1.msra.mxu0 0.0
    %498 = vmatprep.subr.mxu0 0.0
    %499 = vmatpush1.msra.mxu0 0.0
    %500 = vmatprep.subr.mxu0 0.0
    %501 = vmatpush1.msra.mxu0 0.0
    %502 = vmatprep.subr.mxu0 0.0
    %503 = vmatpush1.msra.mxu0 0.0
    %504 = vmatprep.subr.mxu0 0.0
    %505 = vmatpush1.msra.mxu0 0.0
    %506 = vmatprep.subr.mxu0 0.0
    %507 = vmatpush1.msra.mxu0 0.0
    %508 = vmatprep.subr.mxu0 0.0
    %509 = vmatpush1.msra.mxu0 0.0
    %510 = vmatprep.subr.mxu0 0.0
    %511 = vmatpush1.msra.mxu0 0.0
    %512 = vmatprep.subr.mxu0 0.0
    %513 = vmatpush1.msra.mxu0 0.0
    %514 = vmatprep.subr.mxu0 0.0
    %515 = vmatpush1.msra.mxu0 0.0
    %516 = vmatprep.subr.mxu0 0.0
    %517 = vmatpush1.msra.mxu0 0.0
    %518 = vmatprep.subr.mxu0 0.0
    %519 = vmatpush1.msra.mxu0 0.0
    %520 = vmatprep.subr.mxu0 0.0
    %521 = vmatpush1.msra.mxu0 0.0
    %522 = vmatprep.subr.mxu0 0.0
    %523 = vmatpush1.msra.mxu0 0.0
    %524 = vmatprep.subr.mxu0 0.0
    %525 = vmatpush1.msra.mxu0 0.0
    %526 = vmatprep.subr.mxu0 0.0
    %527 = vmatpush1.msra.mxu0 0.0
    %528 = vmatprep.mubr.f32.mxu0 0.0
    %529 = vmatmul.mubr.f32.gmra.mrb[0].mxu0 %v391
    %v530 = vpop.f32.mrb[0].mxu0
    %v531 = vadd.f32 %v385, %v530
    %v532 = vpop.f32.mrb[0].mxu0
    %533 = vdwg.mxu0
    %534 = vst [vmem:[#allocation9] sm:$0xff] %v460
    %535 = vst [vmem:[#allocation9 + $0x8] sm:$0xff] %v462
    %536 = vst [vmem:[#allocation9 + $0x10] sm:$0xff] %v531
    // Predicated region
    $region46: #{tpu_custom_call.1} parent=1 // pred_check
      _
    $region47: #{tpu_custom_call.1} parent=1 // pred_check_branch
      %538 = sbr.rel (0) target = $region49
    $region48: #{tpu_custom_call.1} parent=1 // pred_region
      %s540 = ssub.s32 256, 256
      %541 = vsyncadd [#allocation4], %s540
      %s543 = sshll.u32 [#allocation8], 4
      %s544 = int_to_ptr.vmem [resolvable:$true] %s543
      %546 = dma.vmem_to_hbm [thread:$0]  %s544, 256, %s8, [#allocation4]
    $region49: #{tpu_custom_call.1} parent=1 // pred_fallthru
      _
    // Predicated region
    $region50: #{tpu_custom_call.1} parent=1 // pred_check
      _
    $region51: #{tpu_custom_call.1} parent=1 // pred_check_branch
      %548 = sbr.rel (0) target = $region53
    $region52: #{tpu_custom_call.1} parent=1 // pred_region
      %s550 = ssub.s32 384, 384
      %551 = vsyncadd [#allocation10], %s550
      %s553 = sshll.u32 [#allocation9], 4
      %s554 = int_to_ptr.vmem [resolvable:$true] %s553
      %556 = dma.vmem_to_hbm [thread:$0]  %s554, 384, %s9, [#allocation10]
    $region53: #{tpu_custom_call.1} parent=1 // pred_fallthru
      _
    // Predicated region
    $region54: #{tpu_custom_call.1} parent=1 // pred_check
      _
    $region55: #{tpu_custom_call.1} parent=1 // pred_check_branch
      %558 = sbr.rel (0) target = $region57
    $region56: #{tpu_custom_call.1} parent=1 // pred_region
      %559 = dma.done [#allocation4], 256
    $region57: #{tpu_custom_call.1} parent=1 // pred_fallthru
      _
    // Predicated region
    $region58: #{tpu_custom_call.1} parent=1 // pred_check
      _
    $region59: #{tpu_custom_call.1} parent=1 // pred_check_branch
      %561 = sbr.rel (0) target = $region61
    $region60: #{tpu_custom_call.1} parent=1 // pred_region
      %562 = dma.done [#allocation10], 384
    $region61: #{tpu_custom_call.1} parent=1 // pred_fallthru
      _
    %563 = vsyncpa [#allocation3], 1
    %564 = vsyncpa [#allocation6], 1
    %565 = vsyncpa [#allocation4], 1
    %566 = vsyncpa [#allocation10], 1

</llo_original>
